<compile_context>
chip_gen: v7x
topology: tpu7x:2x2x1
jax: 0.10.0
libtpu: 0.0.40
codegen_flags: <defaults>
</compile_context>

<pallas_src>
import jax
import jax.numpy as jnp
from jax import lax
from jax.experimental import pallas as pl
from jax.experimental.pallas import tpu as pltpu


def _choose_tile_h(H, W, itemsize, target_tile_bytes=4 * 1024 * 1024):
    """Rows per tile: multiple of the sublane packing, capped so a tile is ~4 MiB."""
    sub = max(8, 32 // itemsize)                    # 8 rows for f32, 16 for bf16
    max_rows = max(sub, target_tile_bytes // max(1, W * itemsize))
    th = min(512, H, max_rows)
    if th >= sub:
        th -= th % sub
    return max(th, 1)


def _make_kernel(H, W, th, dtype, has_halo):
    """Build the kernel body. Refs: (x[, top, bot], out, pad_scratch)."""
    mask_rows = has_halo and (H % th != 0)

    def kernel(*refs):
        if has_halo:
            x_ref, top_ref, bot_ref, o_ref, pad_ref = refs
            i = pl.program_id(1)
        else:
            x_ref, o_ref, pad_ref = refs

        # --- assemble the zero-padded (th+2, W+2) working tile in VMEM scratch ---
        # Left / right zero border columns (rewritten every step: parallel-safe).
        zero_col = jnp.zeros((th + 2, 1), dtype)
        pad_ref[:, 0:1] = zero_col
        pad_ref[:, W + 1:W + 2] = zero_col

        # Interior rows = current tile; rows past H masked to 0 for partial tiles.
        xt = x_ref[...]                                          # (th, W)
        if mask_rows:
            g = i * th + lax.broadcasted_iota(jnp.int32, (th, 1), 0)
            xt = jnp.where(g < H, xt, jnp.zeros_like(xt))
        pad_ref[1:th + 1, 1:W + 1] = xt

        # Top / bottom halo rows: default zero, overwritten when a real row exists.
        zero_row = jnp.zeros((1, W), dtype)
        pad_ref[0:1, 1:W + 1] = zero_row
        pad_ref[th + 1:th + 2, 1:W + 1] = zero_row
        if has_halo:
            @pl.when(i > 0)
            def _():
                # th % 8 == 0, so global row i*th - 1 is row 7 of its 8-row block.
                pad_ref[0:1, 1:W + 1] = top_ref[7:8, :]

            @pl.when((i + 1) * th < H)
            def _():
                # global row (i+1)*th is row 0 of its 8-row block.
                pad_ref[th + 1:th + 2, 1:W + 1] = bot_ref[0:1, :]

        # --- 8-neighbor max via a shared horizontal 3-max (balanced max tree) ---
        c_left = pad_ref[:, 0:W]          # (th+2, W): left-neighbor columns
        c_mid = pad_ref[:, 1:W + 1]       # center columns
        c_right = pad_ref[:, 2:W + 2]     # right-neighbor columns

        lr = jnp.maximum(c_left, c_right)                 # left/right pair max
        hmax = jnp.maximum(lr, c_mid)                     # horizontal 3-max per row
        vmax = jnp.maximum(hmax[0:th, :], hmax[2:th + 2, :])   # rows above & below
        hside = jnp.maximum(lr[1:th + 1, :], jnp.zeros((), dtype))  # L/R of center + 0 floor
        o_ref[...] = jnp.maximum(vmax, hside).astype(o_ref.dtype)

    return kernel


def pool_with_hole(x, *, tile_h=None):
    """Pallas implementation of PoolWithHole.forward for x of shape (B, H, W)."""
    assert x.ndim == 3, "PoolWithHole expects a 3-D (B, H, W) input"
    B, H, W = x.shape
    dtype = x.dtype

    th = tile_h if tile_h is not None else _choose_tile_h(H, W, dtype.itemsize)
    th = min(th, H)
    n_tiles = pl.cdiv(H, th)
    has_halo = n_tiles > 1
    if has_halo and th % 8 != 0:
        raise ValueError("tile_h must be a multiple of 8 when H is tiled")

    kernel = _make_kernel(H, W, th, dtype, has_halo)

    if has_halo:
        th8 = th // 8
        n_row_blocks = pl.cdiv(H, 8)
        in_specs = [
            # Current tile.
            pl.BlockSpec((None, th, W), lambda b, i: (b, i, 0)),
            # 8-row block containing the halo row just above the tile (row i*th - 1).
            pl.BlockSpec((None, 8, W),
                         lambda b, i: (b, jnp.maximum(i * th8 - 1, 0), 0)),
            # 8-row block containing the halo row just below the tile (row (i+1)*th).
            pl.BlockSpec((None, 8, W),
                         lambda b, i: (b, jnp.minimum((i + 1) * th8, n_row_blocks - 1), 0)),
        ]
        out_specs = pl.BlockSpec((None, th, W), lambda b, i: (b, i, 0))
        grid = (B, n_tiles)
        dim_sem = ("parallel", "parallel")
        operands = (x, x, x)
    else:
        in_specs = [pl.BlockSpec((None, H, W), lambda b: (b, 0, 0))]
        out_specs = pl.BlockSpec((None, H, W), lambda b: (b, 0, 0))
        grid = (B,)
        dim_sem = ("parallel",)
        operands = (x,)

    return pl.pallas_call(
        kernel,
        out_shape=jax.ShapeDtypeStruct((B, H, W), dtype),
        grid=grid,
        in_specs=in_specs,
        out_specs=out_specs,
        scratch_shapes=[pltpu.VMEM((th + 2, W + 2), dtype)],
        compiler_params=pltpu.CompilerParams(
            dimension_semantics=dim_sem,
            vmem_limit_bytes=48 * 1024 * 1024,
        ),
    )(*operands)


def _reference(x):
    # Pure-JAX reference mirroring the PyTorch loops, for verification only.
    B, H, W = x.shape
    xp = jnp.pad(x, ((0, 0), (1, 1), (1, 1)))
    acc = jnp.zeros((B, H, W), dtype=x.dtype)
    for di in range(3):
        for dj in range(3):
            if di == 1 and dj == 1:
                continue
            acc = jnp.maximum(acc, xp[:, di:di + H, dj:dj + W])
    return acc


if __name__ == "__main__":
    key = jax.random.PRNGKey(0)
    k1, k2 = jax.random.split(key)

    # Small shape consistent with the module's (B, H, W) layout.
    x1 = jax.random.normal(k1, (2, 16, 16), dtype=jnp.float32)
    out1 = jax.block_until_ready(pool_with_hole(x1))
    ref1 = _reference(x1)
    assert out1.shape == x1.shape
    assert jnp.allclose(out1, ref1, atol=1e-6, rtol=1e-6)

    # Exercise the tiled path: multiple H-tiles, halo rows, partial last tile.
    x2 = jax.random.normal(k2, (2, 20, 24), dtype=jnp.float32)
    out2 = jax.block_until_ready(pool_with_hole(x2, tile_h=8))
    ref2 = _reference(x2)
    assert out2.shape == x2.shape
    assert jnp.allclose(out2, ref2, atol=1e-6, rtol=1e-6)

    print("KERNEL_OK")
</pallas_src>

<mosaic_0001>
module attributes {stable_mosaic.version = 11 : i64} {
  func.func @kernel(%arg0: i32, %arg1: memref<1x16x16xf32, #tpu.memory_space<vmem>>, %arg2: memref<1x16x16xf32, #tpu.memory_space<vmem>>, %arg3: memref<18x18xf32, #tpu.memory_space<vmem>>) attributes {dimension_semantics = [#tpu.dimension_semantics<parallel>], iteration_bounds = array<i64: 2>, scalar_prefetch = 0 : i64, scratch_operands = 1 : i64, tpu.core_type = #tpu.core_type<tc>, window_params = [{transform_indices = @transform_0, window_bounds = array<i64: 1, 16, 16>}, {transform_indices = @transform_1, window_bounds = array<i64: 1, 16, 16>}]} {
    %cst = arith.constant 0.000000e+00 : f32
    %0 = vector.broadcast %cst : f32 to vector<18x1xf32>
    %c0 = arith.constant 0 : index
    %c0_0 = arith.constant 0 : index
    %1 = vector.load %arg3[%c0, %c0_0] : memref<18x18xf32, #tpu.memory_space<vmem>>, vector<18x1xf32>
    tpu.vector_store %arg3[%c0, %c0_0], %0 {strides = array<i32>} : memref<18x18xf32, #tpu.memory_space<vmem>>, vector<18x1xf32>,
    %c0_1 = arith.constant 0 : index
    %c17 = arith.constant 17 : index
    %2 = vector.load %arg3[%c0_1, %c17] : memref<18x18xf32, #tpu.memory_space<vmem>>, vector<18x1xf32>
    tpu.vector_store %arg3[%c0_1, %c17], %0 {strides = array<i32>} : memref<18x18xf32, #tpu.memory_space<vmem>>, vector<18x1xf32>,
    %c0_2 = arith.constant 0 : index
    %c0_3 = arith.constant 0 : index
    %c0_4 = arith.constant 0 : index
    %3 = vector.load %arg1[%c0_2, %c0_3, %c0_4] : memref<1x16x16xf32, #tpu.memory_space<vmem>>, vector<1x16x16xf32>
    %4 = vector.shape_cast %3 : vector<1x16x16xf32> to vector<16x16xf32>
    %c1 = arith.constant 1 : index
    %c1_5 = arith.constant 1 : index
    %5 = vector.load %arg3[%c1, %c1_5] : memref<18x18xf32, #tpu.memory_space<vmem>>, vector<16x16xf32>
    tpu.vector_store %arg3[%c1, %c1_5], %4 {strides = array<i32>} : memref<18x18xf32, #tpu.memory_space<vmem>>, vector<16x16xf32>,
    %cst_6 = arith.constant 0.000000e+00 : f32
    %6 = vector.broadcast %cst_6 : f32 to vector<1x16xf32>
    %c0_7 = arith.constant 0 : index
    %c1_8 = arith.constant 1 : index
    %7 = vector.load %arg3[%c0_7, %c1_8] : memref<18x18xf32, #tpu.memory_space<vmem>>, vector<1x16xf32>
    tpu.vector_store %arg3[%c0_7, %c1_8], %6 {strides = array<i32>} : memref<18x18xf32, #tpu.memory_space<vmem>>, vector<1x16xf32>,
    %c17_9 = arith.constant 17 : index
    %c1_10 = arith.constant 1 : index
    %8 = vector.load %arg3[%c17_9, %c1_10] : memref<18x18xf32, #tpu.memory_space<vmem>>, vector<1x16xf32>
    tpu.vector_store %arg3[%c17_9, %c1_10], %6 {strides = array<i32>} : memref<18x18xf32, #tpu.memory_space<vmem>>, vector<1x16xf32>,
    %c0_11 = arith.constant 0 : index
    %c0_12 = arith.constant 0 : index
    %9 = vector.load %arg3[%c0_11, %c0_12] : memref<18x18xf32, #tpu.memory_space<vmem>>, vector<18x16xf32>
    %c0_13 = arith.constant 0 : index
    %c1_14 = arith.constant 1 : index
    %10 = vector.load %arg3[%c0_13, %c1_14] : memref<18x18xf32, #tpu.memory_space<vmem>>, vector<18x16xf32>
    %c0_15 = arith.constant 0 : index
    %c2 = arith.constant 2 : index
    %11 = vector.load %arg3[%c0_15, %c2] : memref<18x18xf32, #tpu.memory_space<vmem>>, vector<18x16xf32>
    %12 = arith.maximumf %9, %11 : vector<18x16xf32>
    %13 = arith.maximumf %12, %10 : vector<18x16xf32>
    %14 = vector.extract_strided_slice %13 {offsets = [0, 0], sizes = [16, 16], strides = [1, 1]} : vector<18x16xf32> to vector<16x16xf32>
    %15 = vector.extract_strided_slice %13 {offsets = [2, 0], sizes = [16, 16], strides = [1, 1]} : vector<18x16xf32> to vector<16x16xf32>
    %16 = arith.maximumf %14, %15 : vector<16x16xf32>
    %17 = vector.extract_strided_slice %12 {offsets = [1, 0], sizes = [16, 16], strides = [1, 1]} : vector<18x16xf32> to vector<16x16xf32>
    %cst_16 = arith.constant 0.000000e+00 : f32
    %18 = vector.broadcast %cst_16 : f32 to vector<16x16xf32>
    %19 = arith.maximumf %17, %18 : vector<16x16xf32>
    %20 = arith.maximumf %16, %19 : vector<16x16xf32>
    %c0_17 = arith.constant 0 : index
    %c0_18 = arith.constant 0 : index
    %c0_19 = arith.constant 0 : index
    %21 = vector.load %arg2[%c0_17, %c0_18, %c0_19] : memref<1x16x16xf32, #tpu.memory_space<vmem>>, vector<1x16x16xf32>
    %22 = vector.shape_cast %21 : vector<1x16x16xf32> to vector<16x16xf32>
    %23 = vector.shape_cast %20 : vector<16x16xf32> to vector<1x16x16xf32>
    tpu.vector_store %arg2[%c0_17, %c0_18, %c0_19], %23 {strides = array<i32>} : memref<1x16x16xf32, #tpu.memory_space<vmem>>, vector<1x16x16xf32>,
    return
  }
  func.func @transform_0(%arg0: i32) -> (i32, i32, i32) {
    %c0_i32 = arith.constant 0 : i32
    %c0_i32_0 = arith.constant 0 : i32
    %c0_i32_1 = arith.constant 0 : i32
    return %arg0, %c0_i32, %c0_i32_0 : i32, i32, i32
  }
  func.func @transform_1(%arg0: i32) -> (i32, i32, i32) {
    %c0_i32 = arith.constant 0 : i32
    %c0_i32_0 = arith.constant 0 : i32
    %c0_i32_1 = arith.constant 0 : i32
    return %arg0, %c0_i32, %c0_i32_0 : i32, i32, i32
  }
}

</mosaic_0001>

<llo_original>
// kernel: tpu_custom_call.1
$region0: #{tpu_custom_call.1}
  #allocation0 [shape = 'u32[]', space=smem, size = 0x4, offset = 0x4, fixed_abs, tag = 'smem constant byte address 0x4 - core index']
  #allocation1 [shape = 'u32[144,128]{1,0:T(1,128)}', space=vmem, size = 0x12000, scoped, tag = 'internal scratch']
  #allocation2 [shape = 'f32[18,18]{1,0:T(8,128)}', space=vmem, size = 0x3000, scoped, tag = 'scratch operand']
  %s0 = inlined_call_operand.hbm [shape: f32[2,16,16], index: 0, kind: input, shape index: {}]
  %s1 = inlined_call_operand.hbm [shape: f32[2,16,16], index: 1, kind: output, shape index: {}]
  %s2 = sld [smem:[#allocation0]]
  $region41: #{tpu_custom_call.1} parent=0
    _
  %s4 = ssub.s32 1, %s2
  %s5 = scalar_select 0, %s4, %s2
  $region1: #{tpu_custom_call.1} parent=0
    #allocation3 [shape = 'u8[16384]{0}', space=vmem, size = 0x4000, scoped, tag = 'input window, operand 0']
    #allocation4 [shape = 's32[2]{0}', space=sflag, size = 0x8, scoped, tag = 'scoped memory for tpu_custom_call.1']
    #allocation5 [shape = 's32[2]{0}', space=sflag, size = 0x8, scoped, tag = 'scoped memory for tpu_custom_call.1']
    #allocation6 [shape = 'u8[16384]{0}', space=vmem, size = 0x4000, scoped, tag = 'output window, operand 0']
    %6 = vsyncpa [#allocation4], 0
    %s7 = scalar_lea.sflag [#allocation4], 1
    %8 = vsyncpa %s7, 0
    %9 = vsyncpa [#allocation5], 0
    %s10 = scalar_lea.sflag [#allocation5], 1
    %11 = vsyncpa %s10, 0
    loop: start=0, step=1, limit=4
    $region2: #{tpu_custom_call.1} parent=1 // loop_pre_header
      _
    $region3: #{tpu_custom_call.1} parent=1 // loop_header
      %s13 = sphi 0, %s17
      %p14 = scmp.ge.s32.totalorder %s13, 4
      %s23 = sphi 0, %s25
      %s26 = sphi 0, %s23
      %s27 = sphi 0, %s26
      %s43 = sphi 0, %s27
      %s49 = sphi 0, %s51
      %s52 = sphi 0, %s49
      %s53 = sphi 0, %s52
      %s69 = sphi 0, %s53
    $region4: #{tpu_custom_call.1} parent=1 // loop_header_branch
      %16 = sbr.rel (%p14) target = $region8
    $region5: #{tpu_custom_call.1} parent=1 // loop_body
      %s18 = ssub.s32 %s13, 1
      %s19 = ssub.s32 %s13, 2
      %s20 = sadd.s32 %s13, 1
      %s21 = ssub.s32 %s13, %s20
      %p22 = scmp.eq.s32.totalorder %s21, 0
      %s24 = sadd.s32 %s23, 1
      %s25 = scalar_select %p22, %s23, %s24
      %p28 = pneg %p22
      %p29 = scmp.eq.s32.totalorder %s13, 1
      %p30 = por %p28, %p29
      %p31 = scmp.ne.s32.totalorder %s23, %s26
      %p32 = scmp.eq.s32.totalorder %s13, 0
      %p33 = por %p31, %p32
      %p34 = scmp.ne.s32.totalorder %s23, %s26
      %p35 = scmp.eq.s32.totalorder %s18, 1
      %p36 = por %p34, %p35
      %p37 = scmp.ne.s32.totalorder %s26, %s27
      %p38 = scmp.eq.s32.totalorder %s18, 0
      %p39 = por %p37, %p38
      %p40 = scmp.ne.s32.totalorder %s26, %s27
      %p41 = scmp.eq.s32.totalorder %s19, 1
      %p42 = por %p40, %p41
      %p44 = scmp.ne.s32.totalorder %s27, %s43
      %p45 = scmp.eq.s32.totalorder %s19, 0
      %p46 = por %p44, %p45
      %s47 = ssub.s32 %s13, %s20
      %p48 = scmp.eq.s32.totalorder %s47, 0
      %s50 = sadd.s32 %s49, 1
      %s51 = scalar_select %p48, %s49, %s50
      %p54 = pneg %p48
      %p55 = scmp.eq.s32.totalorder %s13, 1
      %p56 = por %p54, %p55
      %p57 = scmp.ne.s32.totalorder %s49, %s52
      %p58 = scmp.eq.s32.totalorder %s13, 0
      %p59 = por %p57, %p58
      %p60 = scmp.ne.s32.totalorder %s49, %s52
      %p61 = scmp.eq.s32.totalorder %s18, 1
      %p62 = por %p60, %p61
      %p63 = scmp.ne.s32.totalorder %s52, %s53
      %p64 = scmp.eq.s32.totalorder %s18, 0
      %p65 = por %p63, %p64
      %p66 = scmp.ne.s32.totalorder %s52, %s53
      %p67 = scmp.eq.s32.totalorder %s19, 1
      %p68 = por %p66, %p67
      %p70 = scmp.ne.s32.totalorder %s53, %s69
      %p71 = scmp.eq.s32.totalorder %s19, 0
      %p72 = por %p70, %p71
      %p73 = scmp.le.s32.totalorder 1, %s13
      %p74 = scmp.lt.s32.totalorder %s13, 3
      %p75 = pnand %p73, %p74
      %p76 = pneg %p75
      // Predicated region
      $region9: #{tpu_custom_call.1} parent=5 // pred_check
        _
      $region10: #{tpu_custom_call.1} parent=5 // pred_check_branch
        %78 = sbr.rel (%p75) target = $region12
      $region11: #{tpu_custom_call.1} parent=5 // pred_region
        %s79 = ssub.s32 %s13, 1
      $region12: #{tpu_custom_call.1} parent=5 // pred_fallthru
        _
      %p80 = scmp.lt.s32.totalorder %s13, 2
      // Predicated region
      $region13: #{tpu_custom_call.1} parent=5 // pred_check
        %p81 = pneg %p80
      $region14: #{tpu_custom_call.1} parent=5 // pred_check_branch
        %83 = sbr.rel (%p81) target = $region16
      $region15: #{tpu_custom_call.1} parent=5 // pred_region
        // Predicated region
        $region17: #{tpu_custom_call.1} parent=15 // pred_check
          %p84 = pneg %p33
        $region18: #{tpu_custom_call.1} parent=15 // pred_check_branch
          %86 = sbr.rel (%p84) target = $region20
        $region19: #{tpu_custom_call.1} parent=15 // pred_region
          %s87 = sand.u32 %s23, 1
          %s88 = scalar_lea.sflag [#allocation4], %s87
          %s89 = sand.u32 %s23, 1
          %s90 = smul.addr %s89, 16
          %s91 = scalar_lea.vmem [#allocation3], %s90
          %s93 = ssub.s32 256, 256
          %94 = vsyncadd %s88, %s93
          %s95 = smul.addr %s13, 2
          %s96 = smul.addr %s95, 128
          %s97 = scalar_lea.hbm %s0, %s96
          %s98 = sshll.u32 %s91, 4
          %s99 = int_to_ptr.vmem [resolvable:$true] %s98
          %104 = dma.hbm_to_vmem [thread:$0]  %s97, 256, %s99, %s88, 128, 128, 8
        $region20: #{tpu_custom_call.1} parent=15 // pred_fallthru
          _
      $region16: #{tpu_custom_call.1} parent=5 // pred_fallthru
        _
      %p105 = scmp.le.s32.totalorder 1, %s13
      %p106 = scmp.lt.s32.totalorder %s13, 3
      %p107 = pnand %p105, %p106
      %p108 = pneg %p107
      // Predicated region
      $region21: #{tpu_custom_call.1} parent=5 // pred_check
        _
      $region22: #{tpu_custom_call.1} parent=5 // pred_check_branch
        %110 = sbr.rel (%p107) target = $region24
      $region23: #{tpu_custom_call.1} parent=5 // pred_region
        %s111 = ssub.s32 %s13, 1
        %s112 = sand.u32 %s26, 1
        %s113 = scalar_lea.sflag [#allocation4], %s112
        %s114 = sand.u32 %s26, 1
        %s115 = smul.addr %s114, 16
        %s116 = scalar_lea.vmem [#allocation3], %s115
        // Predicated region
        $region25: #{tpu_custom_call.1} parent=23 // pred_check
          %p117 = pneg %p39
        $region26: #{tpu_custom_call.1} parent=23 // pred_check_branch
          %119 = sbr.rel (%p117) target = $region28
        $region27: #{tpu_custom_call.1} parent=23 // pred_region
          %120 = dma.done %s113, 256
        $region28: #{tpu_custom_call.1} parent=23 // pred_fallthru
          _
        %s121 = sand.u32 %s26, 1
        %s122 = scalar_lea.sflag [#allocation4], %s121
        %s123 = sand.u32 %s26, 1
        %s124 = smul.addr %s123, 16
        %s125 = scalar_lea.vmem [#allocation3], %s124
        %p126 = pneg %p39
        %p127 = pneg %p36
        %p128 = pneg %p65
        %p129 = pneg %p62
        %s130 = sand.u32 %s52, 1
        %s131 = scalar_lea.sflag [#allocation5], %s130
        %s132 = sand.u32 %s52, 1
        %s133 = smul.addr %s132, 16
        %s134 = scalar_lea.vmem [#allocation6], %s133
        %vm135 = vcmask 7168
        %136 = vst.msk [vmem:[#allocation2] sm:$0xff] %vm135, 0.0
        %137 = vst.msk [vmem:[#allocation2 + $0x8] sm:$0xff] %vm135, 0.0
        %vm138 = vcmask 1024
        %139 = vst.msk [vmem:[#allocation2 + $0x10] sm:$0x3] %vm138, 0.0
        %vm140 = vcmask 146568
        %141 = vst.msk [vmem:[#allocation2] sm:$0xff] %vm140, 0.0
        %142 = vst.msk [vmem:[#allocation2 + $0x8] sm:$0xff] %vm140, 0.0
        %vm143 = vcmask 140424
        %144 = vst.msk [vmem:[#allocation2 + $0x10] sm:$0x3] %vm143, 0.0
        %v145 = vld [vmem:[%s116] sm:$0xff]
        %v146 = vld [vmem:[%s116 + $0x8] sm:$0xff]
        %149 = vrot.lane.b32.xlu0 %v145, 1
        %v150 = vpop.permute.xlu0 %149
        %151 = vrot.lane.b32.xlu0 %v146, 1
        %v152 = vpop.permute.xlu0 %151
        %vm155 = vcmask 138248
        %156 = vst.msk [vmem:[#allocation2 + $0x1] sm:$0xff] %vm155, %v150
        %157 = vst.msk [vmem:[#allocation2 + $0x9] sm:$0xff] %vm155, %v152
        %vm158 = vcmask 131080
        %159 = vst.msk [vmem:[#allocation2] sm:$0x1] %vm158, 0.0
        %160 = vst.msk [vmem:[#allocation2 + $0x11] sm:$0x1] %vm158, 0.0
        %v161 = vld [vmem:[#allocation2] sm:$0xff]
        %v162 = vld [vmem:[#allocation2 + $0x8] sm:$0xff]
        %v163 = vld [vmem:[#allocation2 + $0x10] sm:$0x3]
        %167 = vrot.lane.b32.xlu0 %v161, 126
        %v168 = vpop.permute.xlu0 %167
        %169 = vrot.lane.b32.xlu0 %v162, 126
        %v170 = vpop.permute.xlu0 %169
        %171 = vrot.lane.b32.xlu0 %v163, 126
        %v172 = vpop.permute.xlu0 %171
        %v176 = vmax.f32 %v161, %v168
        %v177 = vmax.f32 %v162, %v170
        %v178 = vmax.f32 %v163, %v172
        %179 = vrot.lane.b32.xlu0 %v161, 127
        %v180 = vpop.permute.xlu0 %179
        %181 = vrot.lane.b32.xlu0 %v162, 127
        %v182 = vpop.permute.xlu0 %181
        %183 = vrot.lane.b32.xlu0 %v163, 127
        %v184 = vpop.permute.xlu0 %183
        %v188 = vmax.f32 %v176, %v180
        %v189 = vmax.f32 %v177, %v182
        %v190 = vmax.f32 %v178, %v184
        %vm194 = vcmask 1045504
        %v195 = vrot.slane %v188, 2
        %v196 = vrot.slane %v189, 2
        %v197 = vsel %vm194, %v195, %v196
        %v198 = vrot.slane %v190, 2
        %v199 = vsel %vm194, %v196, %v198
        %v202 = vmax.f32 %v188, %v197
        %v203 = vmax.f32 %v189, %v199
        %v204 = vmax.f32 %v176, 0.0
        %v205 = vmax.f32 %v177, 0.0
        %v206 = vmax.f32 %v178, 0.0
        %vm210 = vcmask 1046528
        %v211 = vrot.slane %v204, 1
        %v212 = vrot.slane %v205, 1
        %v213 = vsel %vm210, %v211, %v212
        %v214 = vrot.slane %v206, 1
        %v215 = vsel %vm210, %v212, %v214
        %v218 = vmax.f32 %v202, %v213
        %v219 = vmax.f32 %v203, %v215
        %vm220 = vcmask 130048
        %221 = vst.msk [vmem:[%s134] sm:$0xff] %vm220, %v218
        %222 = vst.msk [vmem:[%s134 + $0x8] sm:$0xff] %vm220, %v219
        %s223 = sand.u32 %s52, 1
        %s224 = scalar_lea.sflag [#allocation5], %s223
        %s225 = sand.u32 %s52, 1
        %s226 = smul.addr %s225, 16
        %s227 = scalar_lea.vmem [#allocation6], %s226
        // Predicated region
        $region29: #{tpu_custom_call.1} parent=23 // pred_check
          %p228 = pneg %p62
        $region30: #{tpu_custom_call.1} parent=23 // pred_check_branch
          %230 = sbr.rel (%p228) target = $region32
        $region31: #{tpu_custom_call.1} parent=23 // pred_region
          %s232 = ssub.s32 256, 256
          %233 = vsyncadd %s224, %s232
          %s234 = smul.addr %s18, 2
          %s235 = smul.addr %s234, 128
          %s236 = scalar_lea.hbm %s1, %s235
          %s237 = sshll.u32 %s227, 4
          %s238 = int_to_ptr.vmem [resolvable:$true] %s237
          %243 = dma.vmem_to_hbm [thread:$0]  %s238, 256, %s236, %s224, 128, 128, 8
        $region32: #{tpu_custom_call.1} parent=23 // pred_fallthru
          _
      $region24: #{tpu_custom_call.1} parent=5 // pred_fallthru
        _
      %p244 = scmp.le.s32.totalorder 2, %s13
      // Predicated region
      $region33: #{tpu_custom_call.1} parent=5 // pred_check
        %p245 = pneg %p244
      $region34: #{tpu_custom_call.1} parent=5 // pred_check_branch
        %247 = sbr.rel (%p245) target = $region36
      $region35: #{tpu_custom_call.1} parent=5 // pred_region
        %s248 = ssub.s32 %s13, 2
        // Predicated region
        $region37: #{tpu_custom_call.1} parent=35 // pred_check
          %p249 = pneg %p68
        $region38: #{tpu_custom_call.1} parent=35 // pred_check_branch
          %251 = sbr.rel (%p249) target = $region40
        $region39: #{tpu_custom_call.1} parent=35 // pred_region
          %s252 = sand.u32 %s53, 1
          %s253 = scalar_lea.sflag [#allocation5], %s252
          %s254 = sand.u32 %s53, 1
          %s255 = smul.addr %s254, 16
          %s256 = scalar_lea.vmem [#allocation6], %s255
          %257 = dma.done %s253, 256
        $region40: #{tpu_custom_call.1} parent=35 // pred_fallthru
          _
      $region36: #{tpu_custom_call.1} parent=5 // pred_fallthru
        _
    $region6: #{tpu_custom_call.1} parent=1 // loop_footer
      %s17 = sadd.s32 1, %s13
    $region7: #{tpu_custom_call.1} parent=1 // loop_footer_branch
      %12 = sbr.rel target = $region3
    $region8: #{tpu_custom_call.1} parent=1 // loop_exit
      _
    %258 = vsyncpa [#allocation4], 1
    %s259 = scalar_lea.sflag [#allocation4], 1
    %260 = vsyncpa %s259, 1
    %261 = vsyncpa [#allocation5], 1
    %s262 = scalar_lea.sflag [#allocation5], 1
    %263 = vsyncpa %s262, 1

</llo_original>
